<compile_context>
chip_gen: v5e
topology: v5e:2x2
jax: 0.10.0
libtpu: 0.0.40
codegen_flags: <defaults>
</compile_context>

<pallas_src>
import jax
import jax.numpy as jnp
from jax import lax
from jax.experimental import pallas as pl
from jax.experimental.pallas import tpu as pltpu

_MAX_BLOCK_B = 1024  # lane-tile cap; keeps (H, TB) f32 intermediates VMEM-safe


def _critic_kernel(x_ref, u_ref, w1_ref, b1_ref, w2_ref, b2_ref,
                   w3_ref, b3_ref, outT_ref, xu_ref):
    S = x_ref.shape[1]
    A = u_ref.shape[1]

    # In-kernel "concat": stage the batch-major x/u blocks side by side in one
    # VMEM scratch so layer 1 is a single MXU pass over K = S + A.
    xu_ref[:, :S] = x_ref[...]
    xu_ref[:, S:S + A] = u_ref[...]

    # Layer 1: h1^T = relu(W1 @ [x u]^T + b1)            -> (H, TB)
    # Contract on the last axis of both operands (trans_b form) so no
    # activation transpose is needed outside the kernel.
    h1 = lax.dot_general(w1_ref[...], xu_ref[...],
                         dimension_numbers=(((1,), (1,)), ((), ())),
                         preferred_element_type=jnp.float32)
    h1 = jnp.maximum(h1 + b1_ref[...].astype(jnp.float32), 0.0)

    # Layer 2: h2^T = relu(W2 @ h1^T + b2)               -> (H, TB)
    h2 = jnp.dot(w2_ref[...], h1.astype(w2_ref.dtype),
                 preferred_element_type=jnp.float32)
    h2 = jnp.maximum(h2 + b2_ref[...].astype(jnp.float32), 0.0)

    # Layer 3 on the VPU/XLU: q^T = sum_H(w3_col * h2) + b3   -> (1, TB)
    q = jnp.sum(w3_ref[...].astype(jnp.float32) * h2, axis=0, keepdims=True)
    outT_ref[...] = (q + b3_ref[0, 0]).astype(outT_ref.dtype)


def critic_forward(x, u, params, *, block_b=None, vmem_limit_bytes=None):
    """Fused Pallas forward pass of the Critic MLP.

    x: (B, state_dim), u: (B, action_dim).
    params: w1 (H, S+A), b1 (H,1), w2 (H,H), b2 (H,1), w3 (H,1), b3 (1,1).
            w1/w2 may be pre-cast (once) to bf16 via cast_critic_params;
            accumulation and elementwise math stay f32.
    returns: (B, 1) f32.
    """
    B, S = x.shape
    A = u.shape[1]
    H = params["w2"].shape[0]

    w1, b1 = params["w1"], params["b1"]
    w2, b2 = params["w2"], params["b2"]
    w3, b3 = params["w3"], params["b3"]
    compute_dtype = w1.dtype

    # Activations follow the (pre-cast) weight dtype; cheap, activation-only.
    x = x.astype(compute_dtype)
    u = u.astype(compute_dtype)

    # Batch (lane) tile selection: one grid step whenever the batch fits the
    # cap; otherwise lane-dense multiples of 128 with a cdiv grid (Pallas
    # masks the ragged last block).
    if block_b is None:
        block_b = B if B <= _MAX_BLOCK_B else _MAX_BLOCK_B
    block_b = min(int(block_b), B)
    if block_b < B and block_b % 128 != 0:
        block_b = min(((block_b + 127) // 128) * 128, B)
    grid = (pl.cdiv(B, block_b),)

    # Weights/biases: full-extent block, constant index_map -> VMEM-resident
    # across grid steps.  (For very large H on v7x, also shrink block_b and/or
    # raise vmem_limit_bytes.)
    resident = lambda a: pl.BlockSpec(a.shape, lambda i: (0, 0))

    flops = 2 * B * ((S + A) * H + H * H + H)
    bytes_accessed = int(
        x.size * x.dtype.itemsize + u.size * u.dtype.itemsize
        + w1.size * w1.dtype.itemsize + w2.size * w2.dtype.itemsize
        + (w3.size + b1.size + b2.size + b3.size) * 4 + B * 4)

    cp_kwargs = dict(dimension_semantics=("parallel",))
    if vmem_limit_bytes is not None:
        cp_kwargs["vmem_limit_bytes"] = int(vmem_limit_bytes)

    qT = pl.pallas_call(
        _critic_kernel,
        out_shape=jax.ShapeDtypeStruct((1, B), jnp.float32),
        grid=grid,
        in_specs=[
            pl.BlockSpec((block_b, S), lambda i: (i, 0)),   # x, batch-major
            pl.BlockSpec((block_b, A), lambda i: (i, 0)),   # u, batch-major
            resident(w1), resident(b1),
            resident(w2), resident(b2),
            resident(w3),
            pl.BlockSpec(memory_space=pltpu.MemorySpace.SMEM),  # b3 scalar
        ],
        out_specs=pl.BlockSpec((1, block_b), lambda i: (0, i)),
        scratch_shapes=[pltpu.VMEM((block_b, S + A), compute_dtype)],
        compiler_params=pltpu.CompilerParams(**cp_kwargs),
        cost_estimate=pl.CostEstimate(flops=flops, transcendentals=0,
                                      bytes_accessed=bytes_accessed),
    )(x, u, w1, b1, w2, b2, w3, b3)

    # (1, B) -> (B, 1): free row-major reshape.
    return qT.reshape(B, 1)


def cast_critic_params(params, dtype):
    """Pre-cast the matmul weights ONCE (per review: don't re-cast per call).
    Biases and w3 stay f32 (used on the f32 VPU/XLU epilogue path)."""
    out = dict(params)
    out["w1"] = params["w1"].astype(dtype)
    out["w2"] = params["w2"].astype(dtype)
    return out


def init_critic_params(key, state_dim, action_dim, hidden_size,
                       dtype=jnp.float32):
    """Mirror nn.Linear default init (uniform +/- 1/sqrt(fan_in)); PyTorch
    (out_features, in_features) layout; w3 stored as an (H, 1) column."""
    ks = jax.random.split(key, 6)

    def lin(kw, kb, fan_in, fan_out):
        bound = fan_in ** -0.5
        w = jax.random.uniform(kw, (fan_out, fan_in), jnp.float32, -bound, bound)
        b = jax.random.uniform(kb, (fan_out, 1), jnp.float32, -bound, bound)
        return w, b

    w1, b1 = lin(ks[0], ks[1], state_dim + action_dim, hidden_size)
    w2, b2 = lin(ks[2], ks[3], hidden_size, hidden_size)
    w3, b3 = lin(ks[4], ks[5], hidden_size, 1)
    p = {"w1": w1, "b1": b1, "w2": w2, "b2": b2, "w3": w3.T, "b3": b3}
    if dtype != jnp.float32:
        p = cast_critic_params(p, dtype)
    return p


def critic_reference(x, u, p):
    """Pure-JAX reference mirroring the kernel's exact cast points."""
    dt = p["w1"].dtype
    xu = jnp.concatenate([x.astype(dt), u.astype(dt)], axis=1)
    h1 = lax.dot_general(xu, p["w1"], (((1,), (1,)), ((), ())),
                         preferred_element_type=jnp.float32)
    h1 = jnp.maximum(h1 + p["b1"].T, 0.0)
    h2 = lax.dot_general(h1.astype(p["w2"].dtype), p["w2"],
                         (((1,), (1,)), ((), ())),
                         preferred_element_type=jnp.float32)
    h2 = jnp.maximum(h2 + p["b2"].T, 0.0)
    return h2 @ p["w3"].astype(jnp.float32) + p["b3"]


if __name__ == "__main__":
    # TODO(synk): for real workloads, fuse twin-Q heads / target net / loss
    # into one pallas_call — at these sizes the kernel is launch-bound.
    state_dim, action_dim, hidden_size = 16, 8, 32
    batch = 256

    key = jax.random.PRNGKey(0)
    kx, ku, kp = jax.random.split(key, 3)
    x = jax.random.normal(kx, (batch, state_dim), jnp.float32)
    u = jax.random.normal(ku, (batch, action_dim), jnp.float32)
    params = init_critic_params(kp, state_dim, action_dim, hidden_size)

    q_ref = critic_reference(x, u, params)

    # Default: single grid step over the whole batch (minimal per-step
    # overhead on 1-TC chips).
    q = jax.block_until_ready(critic_forward(x, u, params))
    assert q.shape == (batch, 1), q.shape
    assert jnp.allclose(q, q_ref, atol=5e-4, rtol=5e-4), (
        f"f32 max err {float(jnp.max(jnp.abs(q - q_ref)))}")

    # Explicit lane tiling (grid=(2,)) — what you'd pass on v7x so the
    # "parallel" batch axis shards across both TensorCores.
    q_tiled = jax.block_until_ready(critic_forward(x, u, params, block_b=128))
    assert jnp.allclose(q_tiled, q_ref, atol=5e-4, rtol=5e-4), (
        f"tiled max err {float(jnp.max(jnp.abs(q_tiled - q_ref)))}")

    # Ragged batch: pl.cdiv grid, Pallas masks the partial last block.
    q_rag = jax.block_until_ready(
        critic_forward(x[:200], u[:200], params, block_b=128))
    assert q_rag.shape == (200, 1)
    assert jnp.allclose(q_rag, q_ref[:200], atol=5e-4, rtol=5e-4), (
        f"ragged max err {float(jnp.max(jnp.abs(q_rag - q_ref[:200])))}")

    # Small batch: single full-extent block, grid=(1,).
    q_small = jax.block_until_ready(critic_forward(x[:8], u[:8], params))
    assert jnp.allclose(q_small, q_ref[:8], atol=5e-4, rtol=5e-4)

    # bf16 weights pre-cast ONCE (halves weight/activation DMA bytes on
    # v5e/v6e/v7x); accumulation, bias-add and ReLU stay f32.
    params_bf16 = cast_critic_params(params, jnp.bfloat16)
    q_bf16 = jax.block_until_ready(critic_forward(x, u, params_bf16))
    q_ref_bf16 = critic_reference(x, u, params_bf16)
    assert q_bf16.shape == (batch, 1)
    assert jnp.allclose(q_bf16, q_ref_bf16, atol=2e-3, rtol=2e-3), (
        f"bf16 max err {float(jnp.max(jnp.abs(q_bf16 - q_ref_bf16)))}")

    print("KERNEL_OK")
</pallas_src>

<mosaic_0001>
module attributes {stable_mosaic.version = 11 : i64} {
  func.func @_critic_kernel(%arg0: i32, %arg1: memref<256x16xf32, #tpu.memory_space<vmem>>, %arg2: memref<256x8xf32, #tpu.memory_space<vmem>>, %arg3: memref<32x24xf32, #tpu.memory_space<vmem>>, %arg4: memref<32x1xf32, #tpu.memory_space<vmem>>, %arg5: memref<32x32xf32, #tpu.memory_space<vmem>>, %arg6: memref<32x1xf32, #tpu.memory_space<vmem>>, %arg7: memref<32x1xf32, #tpu.memory_space<vmem>>, %arg8: memref<1x1xf32, #tpu.memory_space<smem>>, %arg9: memref<1x256xf32, #tpu.memory_space<vmem>>, %arg10: memref<256x24xf32, #tpu.memory_space<vmem>>) attributes {dimension_semantics = [#tpu.dimension_semantics<parallel>], iteration_bounds = array<i64: 1>, scalar_prefetch = 0 : i64, scratch_operands = 1 : i64, tpu.core_type = #tpu.core_type<tc>, window_params = [{transform_indices = @transform_0, window_bounds = array<i64: 256, 16>}, {transform_indices = @transform_1, window_bounds = array<i64: 256, 8>}, {pipeline_mode = #tpu.pipeline_mode<synchronous>, transform_indices = @transform_2, window_bounds = array<i64: 32, 24>}, {pipeline_mode = #tpu.pipeline_mode<synchronous>, transform_indices = @transform_3, window_bounds = array<i64: 32, 1>}, {pipeline_mode = #tpu.pipeline_mode<synchronous>, transform_indices = @transform_4, window_bounds = array<i64: 32, 32>}, {pipeline_mode = #tpu.pipeline_mode<synchronous>, transform_indices = @transform_5, window_bounds = array<i64: 32, 1>}, {pipeline_mode = #tpu.pipeline_mode<synchronous>, transform_indices = @transform_6, window_bounds = array<i64: 32, 1>}, {transform_indices = @transform_7, window_bounds = array<i64: 1, 1>}, {transform_indices = @transform_8, window_bounds = array<i64: 1, 256>}]} {
    %c0 = arith.constant 0 : index
    %c0_0 = arith.constant 0 : index
    %0 = vector.load %arg1[%c0, %c0_0] : memref<256x16xf32, #tpu.memory_space<vmem>>, vector<256x16xf32>
    %c0_1 = arith.constant 0 : index
    %c0_2 = arith.constant 0 : index
    %1 = vector.load %arg10[%c0_1, %c0_2] : memref<256x24xf32, #tpu.memory_space<vmem>>, vector<256x16xf32>
    tpu.vector_store %arg10[%c0_1, %c0_2], %0 {strides = array<i32>} : memref<256x24xf32, #tpu.memory_space<vmem>>, vector<256x16xf32>,
    %c0_3 = arith.constant 0 : index
    %c0_4 = arith.constant 0 : index
    %2 = vector.load %arg2[%c0_3, %c0_4] : memref<256x8xf32, #tpu.memory_space<vmem>>, vector<256x8xf32>
    %c0_5 = arith.constant 0 : index
    %c16 = arith.constant 16 : index
    %3 = vector.load %arg10[%c0_5, %c16] : memref<256x24xf32, #tpu.memory_space<vmem>>, vector<256x8xf32>
    tpu.vector_store %arg10[%c0_5, %c16], %2 {strides = array<i32>} : memref<256x24xf32, #tpu.memory_space<vmem>>, vector<256x8xf32>,
    %c0_6 = arith.constant 0 : index
    %c0_7 = arith.constant 0 : index
    %4 = vector.load %arg3[%c0_6, %c0_7] : memref<32x24xf32, #tpu.memory_space<vmem>>, vector<32x24xf32>
    %c0_8 = arith.constant 0 : index
    %c0_9 = arith.constant 0 : index
    %5 = vector.load %arg10[%c0_8, %c0_9] : memref<256x24xf32, #tpu.memory_space<vmem>>, vector<256x24xf32>
    %cst = arith.constant dense<0.000000e+00> : vector<32x256xf32>
    %6 = tpu.matmul %4, %5, %cst {dimension_numbers = #tpu.dot_dimension_numbers<[1], [1], [0], [0], [0, 0, 1, 0], [], []>} : vector<32x24xf32>, vector<256x24xf32>, vector<32x256xf32> -> vector<32x256xf32>
    %c0_10 = arith.constant 0 : index
    %c0_11 = arith.constant 0 : index
    %7 = vector.load %arg4[%c0_10, %c0_11] : memref<32x1xf32, #tpu.memory_space<vmem>>, vector<32x1xf32>
    %8 = vector.broadcast %7 : vector<32x1xf32> to vector<32x256xf32>
    %9 = arith.addf %6, %8 : vector<32x256xf32>
    %cst_12 = arith.constant 0.000000e+00 : f32
    %10 = vector.broadcast %cst_12 : f32 to vector<32x256xf32>
    %11 = arith.maximumf %9, %10 : vector<32x256xf32>
    %c0_13 = arith.constant 0 : index
    %c0_14 = arith.constant 0 : index
    %12 = vector.load %arg5[%c0_13, %c0_14] : memref<32x32xf32, #tpu.memory_space<vmem>>, vector<32x32xf32>
    %cst_15 = arith.constant dense<0.000000e+00> : vector<32x256xf32>
    %13 = tpu.matmul %12, %11, %cst_15 {dimension_numbers = #tpu.dot_dimension_numbers<[1], [0], [0], [1], [0, 0, 1, 1], [], []>} : vector<32x32xf32>, vector<32x256xf32>, vector<32x256xf32> -> vector<32x256xf32>
    %c0_16 = arith.constant 0 : index
    %c0_17 = arith.constant 0 : index
    %14 = vector.load %arg6[%c0_16, %c0_17] : memref<32x1xf32, #tpu.memory_space<vmem>>, vector<32x1xf32>
    %15 = vector.broadcast %14 : vector<32x1xf32> to vector<32x256xf32>
    %16 = arith.addf %13, %15 : vector<32x256xf32>
    %cst_18 = arith.constant 0.000000e+00 : f32
    %17 = vector.broadcast %cst_18 : f32 to vector<32x256xf32>
    %18 = arith.maximumf %16, %17 : vector<32x256xf32>
    %c0_19 = arith.constant 0 : index
    %c0_20 = arith.constant 0 : index
    %19 = vector.load %arg7[%c0_19, %c0_20] : memref<32x1xf32, #tpu.memory_space<vmem>>, vector<32x1xf32>
    %20 = vector.broadcast %19 : vector<32x1xf32> to vector<32x256xf32>
    %21 = arith.mulf %20, %18 : vector<32x256xf32>
    %cst_21 = arith.constant dense<0.000000e+00> : vector<256xf32>
    %22 = vector.multi_reduction <add>, %21, %cst_21 [0] : vector<32x256xf32> to vector<256xf32>
    %23 = vector.shape_cast %22 : vector<256xf32> to vector<1x256xf32>
    %c0_22 = arith.constant 0 : index
    %c0_23 = arith.constant 0 : index
    %24 = memref.load %arg8[%c0_22, %c0_23] : memref<1x1xf32, #tpu.memory_space<smem>>
    %25 = vector.broadcast %24 : f32 to vector<1x256xf32>
    %26 = arith.addf %23, %25 : vector<1x256xf32>
    %c0_24 = arith.constant 0 : index
    %c0_25 = arith.constant 0 : index
    %27 = vector.load %arg9[%c0_24, %c0_25] : memref<1x256xf32, #tpu.memory_space<vmem>>, vector<1x256xf32>
    tpu.vector_store %arg9[%c0_24, %c0_25], %26 {strides = array<i32>} : memref<1x256xf32, #tpu.memory_space<vmem>>, vector<1x256xf32>,
    return
  }
  func.func @transform_0(%arg0: i32) -> (i32, i32) {
    %c0_i32 = arith.constant 0 : i32
    %c0_i32_0 = arith.constant 0 : i32
    return %arg0, %c0_i32 : i32, i32
  }
  func.func @transform_1(%arg0: i32) -> (i32, i32) {
    %c0_i32 = arith.constant 0 : i32
    %c0_i32_0 = arith.constant 0 : i32
    return %arg0, %c0_i32 : i32, i32
  }
  func.func @transform_2(%arg0: i32) -> (i32, i32) {
    %c0_i32 = arith.constant 0 : i32
    %c0_i32_0 = arith.constant 0 : i32
    %c0_i32_1 = arith.constant 0 : i32
    return %c0_i32, %c0_i32_0 : i32, i32
  }
  func.func @transform_3(%arg0: i32) -> (i32, i32) {
    %c0_i32 = arith.constant 0 : i32
    %c0_i32_0 = arith.constant 0 : i32
    %c0_i32_1 = arith.constant 0 : i32
    return %c0_i32, %c0_i32_0 : i32, i32
  }
  func.func @transform_4(%arg0: i32) -> (i32, i32) {
    %c0_i32 = arith.constant 0 : i32
    %c0_i32_0 = arith.constant 0 : i32
    %c0_i32_1 = arith.constant 0 : i32
    return %c0_i32, %c0_i32_0 : i32, i32
  }
  func.func @transform_5(%arg0: i32) -> (i32, i32) {
    %c0_i32 = arith.constant 0 : i32
    %c0_i32_0 = arith.constant 0 : i32
    %c0_i32_1 = arith.constant 0 : i32
    return %c0_i32, %c0_i32_0 : i32, i32
  }
  func.func @transform_6(%arg0: i32) -> (i32, i32) {
    %c0_i32 = arith.constant 0 : i32
    %c0_i32_0 = arith.constant 0 : i32
    %c0_i32_1 = arith.constant 0 : i32
    return %c0_i32, %c0_i32_0 : i32, i32
  }
  func.func @transform_7(%arg0: i32) -> (i32, i32) {
    %c0_i32 = arith.constant 0 : i32
    %c0_i32_0 = arith.constant 0 : i32
    %c0_i32_1 = arith.constant 0 : i32
    return %c0_i32, %c0_i32_0 : i32, i32
  }
  func.func @transform_8(%arg0: i32) -> (i32, i32) {
    %c0_i32 = arith.constant 0 : i32
    %c0_i32_0 = arith.constant 0 : i32
    return %c0_i32, %arg0 : i32, i32
  }
}

</mosaic_0001>

<llo_original>
// kernel: tpu_custom_call.1
$region0: #{tpu_custom_call.1}
  #allocation0 [shape = 'u32[]', space=smem, size = 0x4, offset = 0x4, fixed_abs, tag = 'smem constant byte address 0x4 - core index']
  #allocation1 [shape = 'u32[72,128]{1,0:T(1,128)}', space=vmem, size = 0x9000, scoped, tag = 'internal scratch']
  #allocation2 [shape = 'f32[256,24]{1,0:T(8,128)}', space=vmem, size = 0x20000, scoped, tag = 'scratch operand']
  #allocation3 [shape = 'f32[1,1]{1,0:T(1,128)S(6)}', space=smem, size = 0x200, scoped, tag = 'scoped memory for tpu_custom_call.1']
  %s0 = inlined_call_operand.vmem [shape: f32[256,16], index: 0, kind: input, shape index: {}]
  %s1 = inlined_call_operand.vmem [shape: f32[256,8], index: 1, kind: input, shape index: {}]
  %s2 = inlined_call_operand.vmem [shape: f32[32,24], index: 2, kind: input, shape index: {}]
  %s3 = inlined_call_operand.vmem [shape: f32[32,1], index: 3, kind: input, shape index: {}]
  %s4 = inlined_call_operand.vmem [shape: f32[32,32], index: 4, kind: input, shape index: {}]
  %s5 = inlined_call_operand.vmem [shape: f32[32,1], index: 5, kind: input, shape index: {}]
  %s6 = inlined_call_operand.vmem [shape: f32[32,1], index: 6, kind: input, shape index: {}]
  %s7 = inlined_call_operand.<no memory space> [shape: f32[1,1], index: 7, kind: input, shape index: {}]
  %s8 = inlined_call_operand.hbm [shape: f32[1,256], index: 8, kind: output, shape index: {}]
  %s9 = sld [smem:[#allocation0]]
  $region42: #{tpu_custom_call.1} parent=0
    _
  %s11 = ssub.s32 1, %s9
  %s12 = scalar_select 0, %s11, %s9
  %13 = sst [smem:[#allocation3]] %s7
  $region1: #{tpu_custom_call.1} parent=0
    #allocation4 [shape = 'u8[1024]{0}', space=vmem, size = 0x400, scoped, tag = 'output window, operand 0, single buffered']
    #allocation5 [shape = 's32[1]{0}', space=sflag, size = 0x4, scoped, tag = 'scoped memory for tpu_custom_call.1']
    %14 = vsyncpa [#allocation5], 0
    // Predicated region
    $region2: #{tpu_custom_call.1} parent=1 // pred_check
      _
    $region3: #{tpu_custom_call.1} parent=1 // pred_check_branch
      %16 = sbr.rel (0) target = $region5
    $region4: #{tpu_custom_call.1} parent=1 // pred_region
      _
    $region5: #{tpu_custom_call.1} parent=1 // pred_fallthru
      _
    // Predicated region
    $region6: #{tpu_custom_call.1} parent=1 // pred_check
      _
    $region7: #{tpu_custom_call.1} parent=1 // pred_check_branch
      %18 = sbr.rel (0) target = $region9
    $region8: #{tpu_custom_call.1} parent=1 // pred_region
      _
    $region9: #{tpu_custom_call.1} parent=1 // pred_fallthru
      _
    // Predicated region
    $region10: #{tpu_custom_call.1} parent=1 // pred_check
      _
    $region11: #{tpu_custom_call.1} parent=1 // pred_check_branch
      %20 = sbr.rel (0) target = $region13
    $region12: #{tpu_custom_call.1} parent=1 // pred_region
      _
    $region13: #{tpu_custom_call.1} parent=1 // pred_fallthru
      _
    // Predicated region
    $region14: #{tpu_custom_call.1} parent=1 // pred_check
      _
    $region15: #{tpu_custom_call.1} parent=1 // pred_check_branch
      %22 = sbr.rel (0) target = $region17
    $region16: #{tpu_custom_call.1} parent=1 // pred_region
      _
    $region17: #{tpu_custom_call.1} parent=1 // pred_fallthru
      _
    // Predicated region
    $region18: #{tpu_custom_call.1} parent=1 // pred_check
      _
    $region19: #{tpu_custom_call.1} parent=1 // pred_check_branch
      %24 = sbr.rel (0) target = $region21
    $region20: #{tpu_custom_call.1} parent=1 // pred_region
      _
    $region21: #{tpu_custom_call.1} parent=1 // pred_fallthru
      _
    // Predicated region
    $region22: #{tpu_custom_call.1} parent=1 // pred_check
      _
    $region23: #{tpu_custom_call.1} parent=1 // pred_check_branch
      %26 = sbr.rel (0) target = $region25
    $region24: #{tpu_custom_call.1} parent=1 // pred_region
      _
    $region25: #{tpu_custom_call.1} parent=1 // pred_fallthru
      _
    // Predicated region
    $region26: #{tpu_custom_call.1} parent=1 // pred_check
      _
    $region27: #{tpu_custom_call.1} parent=1 // pred_check_branch
      %28 = sbr.rel (0) target = $region29
    $region28: #{tpu_custom_call.1} parent=1 // pred_region
      _
    $region29: #{tpu_custom_call.1} parent=1 // pred_fallthru
      _
    // Predicated region
    $region30: #{tpu_custom_call.1} parent=1 // pred_check
      _
    $region31: #{tpu_custom_call.1} parent=1 // pred_check_branch
      %30 = sbr.rel (0) target = $region33
    $region32: #{tpu_custom_call.1} parent=1 // pred_region
      _
    $region33: #{tpu_custom_call.1} parent=1 // pred_fallthru
      _
    %v31 = vld [vmem:[%s0] sm:$0xff]
    %v32 = vld [vmem:[%s0 + $0x8] sm:$0xff]
    %v33 = vld [vmem:[%s0 + $0x10] sm:$0xff]
    %v34 = vld [vmem:[%s0 + $0x18] sm:$0xff]
    %v35 = vld [vmem:[%s0 + $0x20] sm:$0xff]
    %v36 = vld [vmem:[%s0 + $0x28] sm:$0xff]
    %v37 = vld [vmem:[%s0 + $0x30] sm:$0xff]
    %v38 = vld [vmem:[%s0 + $0x38] sm:$0xff]
    %v39 = vld [vmem:[%s0 + $0x40] sm:$0xff]
    %v40 = vld [vmem:[%s0 + $0x48] sm:$0xff]
    %v41 = vld [vmem:[%s0 + $0x50] sm:$0xff]
    %v42 = vld [vmem:[%s0 + $0x58] sm:$0xff]
    %v43 = vld [vmem:[%s0 + $0x60] sm:$0xff]
    %v44 = vld [vmem:[%s0 + $0x68] sm:$0xff]
    %v45 = vld [vmem:[%s0 + $0x70] sm:$0xff]
    %v46 = vld [vmem:[%s0 + $0x78] sm:$0xff]
    %v47 = vld [vmem:[%s0 + $0x80] sm:$0xff]
    %v48 = vld [vmem:[%s0 + $0x88] sm:$0xff]
    %v49 = vld [vmem:[%s0 + $0x90] sm:$0xff]
    %v50 = vld [vmem:[%s0 + $0x98] sm:$0xff]
    %v51 = vld [vmem:[%s0 + $0xa0] sm:$0xff]
    %v52 = vld [vmem:[%s0 + $0xa8] sm:$0xff]
    %v53 = vld [vmem:[%s0 + $0xb0] sm:$0xff]
    %v54 = vld [vmem:[%s0 + $0xb8] sm:$0xff]
    %v55 = vld [vmem:[%s0 + $0xc0] sm:$0xff]
    %v56 = vld [vmem:[%s0 + $0xc8] sm:$0xff]
    %v57 = vld [vmem:[%s0 + $0xd0] sm:$0xff]
    %v58 = vld [vmem:[%s0 + $0xd8] sm:$0xff]
    %v59 = vld [vmem:[%s0 + $0xe0] sm:$0xff]
    %v60 = vld [vmem:[%s0 + $0xe8] sm:$0xff]
    %v61 = vld [vmem:[%s0 + $0xf0] sm:$0xff]
    %v62 = vld [vmem:[%s0 + $0xf8] sm:$0xff]
    %vm63 = vcmask 130048
    %64 = vst.msk [vmem:[#allocation2] sm:$0xff] %vm63, %v31
    %65 = vst.msk [vmem:[#allocation2 + $0x8] sm:$0xff] %vm63, %v32
    %66 = vst.msk [vmem:[#allocation2 + $0x10] sm:$0xff] %vm63, %v33
    %67 = vst.msk [vmem:[#allocation2 + $0x18] sm:$0xff] %vm63, %v34
    %68 = vst.msk [vmem:[#allocation2 + $0x20] sm:$0xff] %vm63, %v35
    %69 = vst.msk [vmem:[#allocation2 + $0x28] sm:$0xff] %vm63, %v36
    %70 = vst.msk [vmem:[#allocation2 + $0x30] sm:$0xff] %vm63, %v37
    %71 = vst.msk [vmem:[#allocation2 + $0x38] sm:$0xff] %vm63, %v38
    %72 = vst.msk [vmem:[#allocation2 + $0x40] sm:$0xff] %vm63, %v39
    %73 = vst.msk [vmem:[#allocation2 + $0x48] sm:$0xff] %vm63, %v40
    %74 = vst.msk [vmem:[#allocation2 + $0x50] sm:$0xff] %vm63, %v41
    %75 = vst.msk [vmem:[#allocation2 + $0x58] sm:$0xff] %vm63, %v42
    %76 = vst.msk [vmem:[#allocation2 + $0x60] sm:$0xff] %vm63, %v43
    %77 = vst.msk [vmem:[#allocation2 + $0x68] sm:$0xff] %vm63, %v44
    %78 = vst.msk [vmem:[#allocation2 + $0x70] sm:$0xff] %vm63, %v45
    %79 = vst.msk [vmem:[#allocation2 + $0x78] sm:$0xff] %vm63, %v46
    %80 = vst.msk [vmem:[#allocation2 + $0x80] sm:$0xff] %vm63, %v47
    %81 = vst.msk [vmem:[#allocation2 + $0x88] sm:$0xff] %vm63, %v48
    %82 = vst.msk [vmem:[#allocation2 + $0x90] sm:$0xff] %vm63, %v49
    %83 = vst.msk [vmem:[#allocation2 + $0x98] sm:$0xff] %vm63, %v50
    %84 = vst.msk [vmem:[#allocation2 + $0xa0] sm:$0xff] %vm63, %v51
    %85 = vst.msk [vmem:[#allocation2 + $0xa8] sm:$0xff] %vm63, %v52
    %86 = vst.msk [vmem:[#allocation2 + $0xb0] sm:$0xff] %vm63, %v53
    %87 = vst.msk [vmem:[#allocation2 + $0xb8] sm:$0xff] %vm63, %v54
    %88 = vst.msk [vmem:[#allocation2 + $0xc0] sm:$0xff] %vm63, %v55
    %89 = vst.msk [vmem:[#allocation2 + $0xc8] sm:$0xff] %vm63, %v56
    %90 = vst.msk [vmem:[#allocation2 + $0xd0] sm:$0xff] %vm63, %v57
    %91 = vst.msk [vmem:[#allocation2 + $0xd8] sm:$0xff] %vm63, %v58
    %92 = vst.msk [vmem:[#allocation2 + $0xe0] sm:$0xff] %vm63, %v59
    %93 = vst.msk [vmem:[#allocation2 + $0xe8] sm:$0xff] %vm63, %v60
    %94 = vst.msk [vmem:[#allocation2 + $0xf0] sm:$0xff] %vm63, %v61
    %95 = vst.msk [vmem:[#allocation2 + $0xf8] sm:$0xff] %vm63, %v62
    %v96 = vld [vmem:[%s1] sm:$0xff]
    %v97 = vld [vmem:[%s1 + $0x8] sm:$0xff]
    %v98 = vld [vmem:[%s1 + $0x10] sm:$0xff]
    %v99 = vld [vmem:[%s1 + $0x18] sm:$0xff]
    %v100 = vld [vmem:[%s1 + $0x20] sm:$0xff]
    %v101 = vld [vmem:[%s1 + $0x28] sm:$0xff]
    %v102 = vld [vmem:[%s1 + $0x30] sm:$0xff]
    %v103 = vld [vmem:[%s1 + $0x38] sm:$0xff]
    %v104 = vld [vmem:[%s1 + $0x40] sm:$0xff]
    %v105 = vld [vmem:[%s1 + $0x48] sm:$0xff]
    %v106 = vld [vmem:[%s1 + $0x50] sm:$0xff]
    %v107 = vld [vmem:[%s1 + $0x58] sm:$0xff]
    %v108 = vld [vmem:[%s1 + $0x60] sm:$0xff]
    %v109 = vld [vmem:[%s1 + $0x68] sm:$0xff]
    %v110 = vld [vmem:[%s1 + $0x70] sm:$0xff]
    %v111 = vld [vmem:[%s1 + $0x78] sm:$0xff]
    %v112 = vld [vmem:[%s1 + $0x80] sm:$0xff]
    %v113 = vld [vmem:[%s1 + $0x88] sm:$0xff]
    %v114 = vld [vmem:[%s1 + $0x90] sm:$0xff]
    %v115 = vld [vmem:[%s1 + $0x98] sm:$0xff]
    %v116 = vld [vmem:[%s1 + $0xa0] sm:$0xff]
    %v117 = vld [vmem:[%s1 + $0xa8] sm:$0xff]
    %v118 = vld [vmem:[%s1 + $0xb0] sm:$0xff]
    %v119 = vld [vmem:[%s1 + $0xb8] sm:$0xff]
    %v120 = vld [vmem:[%s1 + $0xc0] sm:$0xff]
    %v121 = vld [vmem:[%s1 + $0xc8] sm:$0xff]
    %v122 = vld [vmem:[%s1 + $0xd0] sm:$0xff]
    %v123 = vld [vmem:[%s1 + $0xd8] sm:$0xff]
    %v124 = vld [vmem:[%s1 + $0xe0] sm:$0xff]
    %v125 = vld [vmem:[%s1 + $0xe8] sm:$0xff]
    %v126 = vld [vmem:[%s1 + $0xf0] sm:$0xff]
    %v127 = vld [vmem:[%s1 + $0xf8] sm:$0xff]
    %160 = vrot.lane.b32.xlu0 %v96, 16
    %v161 = vpop.permute.xlu0 %160
    %162 = vrot.lane.b32.xlu0 %v97, 16
    %v163 = vpop.permute.xlu0 %162
    %164 = vrot.lane.b32.xlu0 %v98, 16
    %v165 = vpop.permute.xlu0 %164
    %166 = vrot.lane.b32.xlu0 %v99, 16
    %v167 = vpop.permute.xlu0 %166
    %168 = vrot.lane.b32.xlu0 %v100, 16
    %v169 = vpop.permute.xlu0 %168
    %170 = vrot.lane.b32.xlu0 %v101, 16
    %v171 = vpop.permute.xlu0 %170
    %172 = vrot.lane.b32.xlu0 %v102, 16
    %v173 = vpop.permute.xlu0 %172
    %174 = vrot.lane.b32.xlu0 %v103, 16
    %v175 = vpop.permute.xlu0 %174
    %176 = vrot.lane.b32.xlu0 %v104, 16
    %v177 = vpop.permute.xlu0 %176
    %178 = vrot.lane.b32.xlu0 %v105, 16
    %v179 = vpop.permute.xlu0 %178
    %180 = vrot.lane.b32.xlu0 %v106, 16
    %v181 = vpop.permute.xlu0 %180
    %182 = vrot.lane.b32.xlu0 %v107, 16
    %v183 = vpop.permute.xlu0 %182
    %184 = vrot.lane.b32.xlu0 %v108, 16
    %v185 = vpop.permute.xlu0 %184
    %186 = vrot.lane.b32.xlu0 %v109, 16
    %v187 = vpop.permute.xlu0 %186
    %188 = vrot.lane.b32.xlu0 %v110, 16
    %v189 = vpop.permute.xlu0 %188
    %190 = vrot.lane.b32.xlu0 %v111, 16
    %v191 = vpop.permute.xlu0 %190
    %192 = vrot.lane.b32.xlu0 %v112, 16
    %v193 = vpop.permute.xlu0 %192
    %194 = vrot.lane.b32.xlu0 %v113, 16
    %v195 = vpop.permute.xlu0 %194
    %196 = vrot.lane.b32.xlu0 %v114, 16
    %v197 = vpop.permute.xlu0 %196
    %198 = vrot.lane.b32.xlu0 %v115, 16
    %v199 = vpop.permute.xlu0 %198
    %200 = vrot.lane.b32.xlu0 %v116, 16
    %v201 = vpop.permute.xlu0 %200
    %202 = vrot.lane.b32.xlu0 %v117, 16
    %v203 = vpop.permute.xlu0 %202
    %204 = vrot.lane.b32.xlu0 %v118, 16
    %v205 = vpop.permute.xlu0 %204
    %206 = vrot.lane.b32.xlu0 %v119, 16
    %v207 = vpop.permute.xlu0 %206
    %208 = vrot.lane.b32.xlu0 %v120, 16
    %v209 = vpop.permute.xlu0 %208
    %210 = vrot.lane.b32.xlu0 %v121, 16
    %v211 = vpop.permute.xlu0 %210
    %212 = vrot.lane.b32.xlu0 %v122, 16
    %v213 = vpop.permute.xlu0 %212
    %214 = vrot.lane.b32.xlu0 %v123, 16
    %v215 = vpop.permute.xlu0 %214
    %216 = vrot.lane.b32.xlu0 %v124, 16
    %v217 = vpop.permute.xlu0 %216
    %218 = vrot.lane.b32.xlu0 %v125, 16
    %v219 = vpop.permute.xlu0 %218
    %220 = vrot.lane.b32.xlu0 %v126, 16
    %v221 = vpop.permute.xlu0 %220
    %222 = vrot.lane.b32.xlu0 %v127, 16
    %v223 = vpop.permute.xlu0 %222
    %vm256 = vcmask 195712
    %257 = vst.msk [vmem:[#allocation2] sm:$0xff] %vm256, %v161
    %258 = vst.msk [vmem:[#allocation2 + $0x8] sm:$0xff] %vm256, %v163
    %259 = vst.msk [vmem:[#allocation2 + $0x10] sm:$0xff] %vm256, %v165
    %260 = vst.msk [vmem:[#allocation2 + $0x18] sm:$0xff] %vm256, %v167
    %261 = vst.msk [vmem:[#allocation2 + $0x20] sm:$0xff] %vm256, %v169
    %262 = vst.msk [vmem:[#allocation2 + $0x28] sm:$0xff] %vm256, %v171
    %263 = vst.msk [vmem:[#allocation2 + $0x30] sm:$0xff] %vm256, %v173
    %264 = vst.msk [vmem:[#allocation2 + $0x38] sm:$0xff] %vm256, %v175
    %265 = vst.msk [vmem:[#allocation2 + $0x40] sm:$0xff] %vm256, %v177
    %266 = vst.msk [vmem:[#allocation2 + $0x48] sm:$0xff] %vm256, %v179
    %267 = vst.msk [vmem:[#allocation2 + $0x50] sm:$0xff] %vm256, %v181
    %268 = vst.msk [vmem:[#allocation2 + $0x58] sm:$0xff] %vm256, %v183
    %269 = vst.msk [vmem:[#allocation2 + $0x60] sm:$0xff] %vm256, %v185
    %270 = vst.msk [vmem:[#allocation2 + $0x68] sm:$0xff] %vm256, %v187
    %271 = vst.msk [vmem:[#allocation2 + $0x70] sm:$0xff] %vm256, %v189
    %272 = vst.msk [vmem:[#allocation2 + $0x78] sm:$0xff] %vm256, %v191
    %273 = vst.msk [vmem:[#allocation2 + $0x80] sm:$0xff] %vm256, %v193
    %274 = vst.msk [vmem:[#allocation2 + $0x88] sm:$0xff] %vm256, %v195
    %275 = vst.msk [vmem:[#allocation2 + $0x90] sm:$0xff] %vm256, %v197
    %276 = vst.msk [vmem:[#allocation2 + $0x98] sm:$0xff] %vm256, %v199
    %277 = vst.msk [vmem:[#allocation2 + $0xa0] sm:$0xff] %vm256, %v201
    %278 = vst.msk [vmem:[#allocation2 + $0xa8] sm:$0xff] %vm256, %v203
    %279 = vst.msk [vmem:[#allocation2 + $0xb0] sm:$0xff] %vm256, %v205
    %280 = vst.msk [vmem:[#allocation2 + $0xb8] sm:$0xff] %vm256, %v207
    %281 = vst.msk [vmem:[#allocation2 + $0xc0] sm:$0xff] %vm256, %v209
    %282 = vst.msk [vmem:[#allocation2 + $0xc8] sm:$0xff] %vm256, %v211
    %283 = vst.msk [vmem:[#allocation2 + $0xd0] sm:$0xff] %vm256, %v213
    %284 = vst.msk [vmem:[#allocation2 + $0xd8] sm:$0xff] %vm256, %v215
    %285 = vst.msk [vmem:[#allocation2 + $0xe0] sm:$0xff] %vm256, %v217
    %286 = vst.msk [vmem:[#allocation2 + $0xe8] sm:$0xff] %vm256, %v219
    %287 = vst.msk [vmem:[#allocation2 + $0xf0] sm:$0xff] %vm256, %v221
    %288 = vst.msk [vmem:[#allocation2 + $0xf8] sm:$0xff] %vm256, %v223
    %v289 = vld [vmem:[%s2] sm:$0xff]
    %v290 = vld [vmem:[%s2 + $0x8] sm:$0xff]
    %v291 = vld [vmem:[%s2 + $0x10] sm:$0xff]
    %v292 = vld [vmem:[%s2 + $0x18] sm:$0xff]
    %v293 = vld [vmem:[#allocation2] sm:$0xff]
    %v294 = vld [vmem:[#allocation2 + $0x8] sm:$0xff]
    %v295 = vld [vmem:[#allocation2 + $0x10] sm:$0xff]
    %v296 = vld [vmem:[#allocation2 + $0x18] sm:$0xff]
    %v297 = vld [vmem:[#allocation2 + $0x20] sm:$0xff]
    %v298 = vld [vmem:[#allocation2 + $0x28] sm:$0xff]
    %v299 = vld [vmem:[#allocation2 + $0x30] sm:$0xff]
    %v300 = vld [vmem:[#allocation2 + $0x38] sm:$0xff]
    %v301 = vld [vmem:[#allocation2 + $0x40] sm:$0xff]
    %v302 = vld [vmem:[#allocation2 + $0x48] sm:$0xff]
    %v303 = vld [vmem:[#allocation2 + $0x50] sm:$0xff]
    %v304 = vld [vmem:[#allocation2 + $0x58] sm:$0xff]
    %v305 = vld [vmem:[#allocation2 + $0x60] sm:$0xff]
    %v306 = vld [vmem:[#allocation2 + $0x68] sm:$0xff]
    %v307 = vld [vmem:[#allocation2 + $0x70] sm:$0xff]
    %v308 = vld [vmem:[#allocation2 + $0x78] sm:$0xff]
    %v309 = vld [vmem:[#allocation2 + $0x80] sm:$0xff]
    %v310 = vld [vmem:[#allocation2 + $0x88] sm:$0xff]
    %v311 = vld [vmem:[#allocation2 + $0x90] sm:$0xff]
    %v312 = vld [vmem:[#allocation2 + $0x98] sm:$0xff]
    %v313 = vld [vmem:[#allocation2 + $0xa0] sm:$0xff]
    %v314 = vld [vmem:[#allocation2 + $0xa8] sm:$0xff]
    %v315 = vld [vmem:[#allocation2 + $0xb0] sm:$0xff]
    %v316 = vld [vmem:[#allocation2 + $0xb8] sm:$0xff]
    %v317 = vld [vmem:[#allocation2 + $0xc0] sm:$0xff]
    %v318 = vld [vmem:[#allocation2 + $0xc8] sm:$0xff]
    %v319 = vld [vmem:[#allocation2 + $0xd0] sm:$0xff]
    %v320 = vld [vmem:[#allocation2 + $0xd8] sm:$0xff]
    %v321 = vld [vmem:[#allocation2 + $0xe0] sm:$0xff]
    %v322 = vld [vmem:[#allocation2 + $0xe8] sm:$0xff]
    %v323 = vld [vmem:[#allocation2 + $0xf0] sm:$0xff]
    %v324 = vld [vmem:[#allocation2 + $0xf8] sm:$0xff]
    %v325 = vld [vmem:[%s3] sm:$0xff]
    %v326 = vld [vmem:[%s3 + $0x8] sm:$0xff]
    %v327 = vld [vmem:[%s3 + $0x10] sm:$0xff]
    %v328 = vld [vmem:[%s3 + $0x18] sm:$0xff]
    %330 = vset.pattern.permute.xlu0 0
    %331 = vperm.xlu0 %330, %v325
    %v332 = vpop.permute.xlu0 %331
    %335 = vset.pattern.permute.xlu0 0
    %336 = vperm.xlu0 %335, %v326
    %v337 = vpop.permute.xlu0 %336
    %340 = vset.pattern.permute.xlu0 0
    %341 = vperm.xlu0 %340, %v327
    %v342 = vpop.permute.xlu0 %341
    %345 = vset.pattern.permute.xlu0 0
    %346 = vperm.xlu0 %345, %v328
    %v347 = vpop.permute.xlu0 %346
    %vm349 = vcmask 195584
    %v351 = vsel %vm349, %v289, 0
    %v354 = vsel %vm349, %v290, 0
    %v357 = vsel %vm349, %v291, 0
    %v360 = vsel %vm349, %v292, 0
    %v363 = vsel %vm349, %v293, 0
    %v366 = vsel %vm349, %v294, 0
    %v369 = vsel %vm349, %v295, 0
    %v372 = vsel %vm349, %v296, 0
    %v375 = vsel %vm349, %v297, 0
    %v378 = vsel %vm349, %v298, 0
    %v381 = vsel %vm349, %v299, 0
    %v384 = vsel %vm349, %v300, 0
    %v387 = vsel %vm349, %v301, 0
    %v390 = vsel %vm349, %v302, 0
    %v393 = vsel %vm349, %v303, 0
    %v396 = vsel %vm349, %v304, 0
    %v399 = vsel %vm349, %v305, 0
    %v402 = vsel %vm349, %v306, 0
    %v405 = vsel %vm349, %v307, 0
    %v408 = vsel %vm349, %v308, 0
    %v411 = vsel %vm349, %v309, 0
    %v414 = vsel %vm349, %v310, 0
    %v417 = vsel %vm349, %v311, 0
    %v420 = vsel %vm349, %v312, 0
    %v423 = vsel %vm349, %v313, 0
    %v426 = vsel %vm349, %v314, 0
    %v429 = vsel %vm349, %v315, 0
    %v432 = vsel %vm349, %v316, 0
    %v435 = vsel %vm349, %v317, 0
    %v438 = vsel %vm349, %v318, 0
    %v441 = vsel %vm349, %v319, 0
    %v444 = vsel %vm349, %v320, 0
    %v447 = vsel %vm349, %v321, 0
    %v450 = vsel %vm349, %v322, 0
    %v453 = vsel %vm349, %v323, 0
    %v456 = vsel %vm349, %v324, 0
    %458 = vmatpush.xpose.msra.mxu0 %v408
    %459 = vmatpush.xpose.msra.mxu0 %v405
    %460 = vmatpush.xpose.msra.mxu0 %v402
    %461 = vmatpush.xpose.msra.mxu0 %v399
    %462 = vmatpush.xpose.msra.mxu0 %v396
    %463 = vmatpush.xpose.msra.mxu0 %v393
    %464 = vmatpush.xpose.msra.mxu0 %v390
    %465 = vmatpush.xpose.msra.mxu0 %v387
    %466 = vmatpush.xpose.msra.mxu0 %v384
    %467 = vmatpush.xpose.msra.mxu0 %v381
    %468 = vmatpush.xpose.msra.mxu0 %v378
    %469 = vmatpush.xpose.msra.mxu0 %v375
    %470 = vmatpush.xpose.msra.mxu0 %v372
    %471 = vmatpush.xpose.msra.mxu0 %v369
    %472 = vmatpush.xpose.msra.mxu0 %v366
    %473 = vmatpush.xpose.msra.mxu0 %v363
    %474 = vmatmul.f32.gmra.mxu0 %v351
    %v475 = vpop.f32.mrf.mxu0
    %v476 = vadd.f32 %v332, %v475
    %477 = vmatmul.f32.gmra.mxu0 %v354
    %v478 = vpop.f32.mrf.mxu0
    %v479 = vadd.f32 %v337, %v478
    %480 = vmatmul.f32.gmra.mxu0 %v357
    %v481 = vpop.f32.mrf.mxu0
    %v482 = vadd.f32 %v342, %v481
    %483 = vmatmul.f32.gmra.mxu0 %v360
    %v484 = vpop.f32.mrf.mxu0
    %v485 = vadd.f32 %v347, %v484
    %486 = vdwg.mxu0
    %487 = vmatpush.xpose.msra.mxu0 %v456
    %488 = vmatpush.xpose.msra.mxu0 %v453
    %489 = vmatpush.xpose.msra.mxu0 %v450
    %490 = vmatpush.xpose.msra.mxu0 %v447
    %491 = vmatpush.xpose.msra.mxu0 %v444
    %492 = vmatpush.xpose.msra.mxu0 %v441
    %493 = vmatpush.xpose.msra.mxu0 %v438
    %494 = vmatpush.xpose.msra.mxu0 %v435
    %495 = vmatpush.xpose.msra.mxu0 %v432
    %496 = vmatpush.xpose.msra.mxu0 %v429
    %497 = vmatpush.xpose.msra.mxu0 %v426
    %498 = vmatpush.xpose.msra.mxu0 %v423
    %499 = vmatpush.xpose.msra.mxu0 %v420
    %500 = vmatpush.xpose.msra.mxu0 %v417
    %501 = vmatpush.xpose.msra.mxu0 %v414
    %502 = vmatpush.xpose.msra.mxu0 %v411
    %503 = vmatmul.f32.gmra.mxu0 %v351
    %v504 = vpop.f32.mrf.mxu0
    %v505 = vadd.f32 %v332, %v504
    %506 = vmatmul.f32.gmra.mxu0 %v354
    %v507 = vpop.f32.mrf.mxu0
    %v508 = vadd.f32 %v337, %v507
    %509 = vmatmul.f32.gmra.mxu0 %v357
    %v510 = vpop.f32.mrf.mxu0
    %v511 = vadd.f32 %v342, %v510
    %512 = vmatmul.f32.gmra.mxu0 %v360
    %v513 = vpop.f32.mrf.mxu0
    %v514 = vadd.f32 %v347, %v513
    %515 = vdwg.mxu0
    %v516 = vmax.f32 %v476, 0.0
    %v517 = vmax.f32 %v505, 0.0
    %v518 = vmax.f32 %v479, 0.0
    %v519 = vmax.f32 %v508, 0.0
    %v520 = vmax.f32 %v482, 0.0
    %v521 = vmax.f32 %v511, 0.0
    %v522 = vmax.f32 %v485, 0.0
    %v523 = vmax.f32 %v514, 0.0
    %v524 = vld [vmem:[%s4] sm:$0xff]
    %v525 = vld [vmem:[%s4 + $0x8] sm:$0xff]
    %v526 = vld [vmem:[%s4 + $0x10] sm:$0xff]
    %v527 = vld [vmem:[%s4 + $0x18] sm:$0xff]
    %v528 = vld [vmem:[%s5] sm:$0xff]
    %v529 = vld [vmem:[%s5 + $0x8] sm:$0xff]
    %v530 = vld [vmem:[%s5 + $0x10] sm:$0xff]
    %v531 = vld [vmem:[%s5 + $0x18] sm:$0xff]
    %533 = vset.pattern.permute.xlu0 0
    %534 = vperm.xlu0 %533, %v528
    %v535 = vpop.permute.xlu0 %534
    %538 = vset.pattern.permute.xlu0 0
    %539 = vperm.xlu0 %538, %v529
    %v540 = vpop.permute.xlu0 %539
    %543 = vset.pattern.permute.xlu0 0
    %544 = vperm.xlu0 %543, %v530
    %v545 = vpop.permute.xlu0 %544
    %548 = vset.pattern.permute.xlu0 0
    %549 = vperm.xlu0 %548, %v531
    %v550 = vpop.permute.xlu0 %549
    %vm552 = vcmask 261120
    %v554 = vsel %vm552, %v524, 0
    %v557 = vsel %vm552, %v525, 0
    %v560 = vsel %vm552, %v526, 0
    %v563 = vsel %vm552, %v527, 0
    %565 = vmatpush.msra.mxu0 0.0
    %566 = vmatpush.msra.mxu0 0.0
    %567 = vmatpush.msra.mxu0 0.0
    %568 = vmatpush.msra.mxu0 0.0
    %569 = vmatpush.msra.mxu0 0.0
    %570 = vmatpush.msra.mxu0 0.0
    %571 = vmatpush.msra.mxu0 0.0
    %572 = vmatpush.msra.mxu0 0.0
    %573 = vmatpush.msra.mxu0 0.0
    %574 = vmatpush.msra.mxu0 0.0
    %575 = vmatpush.msra.mxu0 0.0
    %576 = vmatpush.msra.mxu0 0.0
    %577 = vmatpush.msra.mxu0 %v522
    %578 = vmatpush.msra.mxu0 %v520
    %579 = vmatpush.msra.mxu0 %v518
    %580 = vmatpush.msra.mxu0 %v516
    %581 = vmatmul.f32.gmra.mxu0 %v554
    %v582 = vpop.f32.mrf.mxu0
    %v583 = vadd.f32 %v535, %v582
    %584 = vmatmul.f32.gmra.mxu0 %v557
    %v585 = vpop.f32.mrf.mxu0
    %v586 = vadd.f32 %v540, %v585
    %587 = vmatmul.f32.gmra.mxu0 %v560
    %v588 = vpop.f32.mrf.mxu0
    %v589 = vadd.f32 %v545, %v588
    %590 = vmatmul.f32.gmra.mxu0 %v563
    %v591 = vpop.f32.mrf.mxu0
    %v592 = vadd.f32 %v550, %v591
    %593 = vdwg.mxu0
    %594 = vmatpush.msra.mxu0 0.0
    %595 = vmatpush.msra.mxu0 0.0
    %596 = vmatpush.msra.mxu0 0.0
    %597 = vmatpush.msra.mxu0 0.0
    %598 = vmatpush.msra.mxu0 0.0
    %599 = vmatpush.msra.mxu0 0.0
    %600 = vmatpush.msra.mxu0 0.0
    %601 = vmatpush.msra.mxu0 0.0
    %602 = vmatpush.msra.mxu0 0.0
    %603 = vmatpush.msra.mxu0 0.0
    %604 = vmatpush.msra.mxu0 0.0
    %605 = vmatpush.msra.mxu0 0.0
    %606 = vmatpush.msra.mxu0 %v523
    %607 = vmatpush.msra.mxu0 %v521
    %608 = vmatpush.msra.mxu0 %v519
    %609 = vmatpush.msra.mxu0 %v517
    %610 = vmatmul.f32.gmra.mxu0 %v554
    %v611 = vpop.f32.mrf.mxu0
    %v612 = vadd.f32 %v535, %v611
    %613 = vmatmul.f32.gmra.mxu0 %v557
    %v614 = vpop.f32.mrf.mxu0
    %v615 = vadd.f32 %v540, %v614
    %616 = vmatmul.f32.gmra.mxu0 %v560
    %v617 = vpop.f32.mrf.mxu0
    %v618 = vadd.f32 %v545, %v617
    %619 = vmatmul.f32.gmra.mxu0 %v563
    %v620 = vpop.f32.mrf.mxu0
    %v621 = vadd.f32 %v550, %v620
    %622 = vdwg.mxu0
    %v623 = vmax.f32 %v583, 0.0
    %v624 = vmax.f32 %v612, 0.0
    %v625 = vmax.f32 %v586, 0.0
    %v626 = vmax.f32 %v615, 0.0
    %v627 = vmax.f32 %v589, 0.0
    %v628 = vmax.f32 %v618, 0.0
    %v629 = vmax.f32 %v592, 0.0
    %v630 = vmax.f32 %v621, 0.0
    %v631 = vld [vmem:[%s6] sm:$0xff]
    %v632 = vld [vmem:[%s6 + $0x8] sm:$0xff]
    %v633 = vld [vmem:[%s6 + $0x10] sm:$0xff]
    %v634 = vld [vmem:[%s6 + $0x18] sm:$0xff]
    %636 = vset.pattern.permute.xlu0 0
    %637 = vperm.xlu0 %636, %v631
    %v638 = vpop.permute.xlu0 %637
    %641 = vset.pattern.permute.xlu0 0
    %642 = vperm.xlu0 %641, %v632
    %v643 = vpop.permute.xlu0 %642
    %646 = vset.pattern.permute.xlu0 0
    %647 = vperm.xlu0 %646, %v633
    %v648 = vpop.permute.xlu0 %647
    %651 = vset.pattern.permute.xlu0 0
    %652 = vperm.xlu0 %651, %v634
    %v653 = vpop.permute.xlu0 %652
    %v655 = vmul.f32 %v638, %v623
    %v656 = vmul.f32 %v638, %v624
    %v657 = vmul.f32 %v643, %v625
    %v658 = vmul.f32 %v643, %v626
    %v659 = vmul.f32 %v648, %v627
    %v660 = vmul.f32 %v648, %v628
    %v661 = vmul.f32 %v653, %v629
    %v662 = vmul.f32 %v653, %v630
    %v663 = vadd.f32 %v655, %v657
    %v664 = vadd.f32 %v663, %v659
    %v665 = vadd.f32 %v664, %v661
    %v666 = vrot.slane %v665, 4
    %v667 = vadd.f32 %v665, %v666
    %v668 = vrot.slane %v667, 2
    %v669 = vadd.f32 %v667, %v668
    %v670 = vrot.slane %v669, 1
    %v671 = vadd.f32 %v669, %v670
    %v672 = vadd.f32 %v656, %v658
    %v673 = vadd.f32 %v672, %v660
    %v674 = vadd.f32 %v673, %v662
    %v675 = vrot.slane %v674, 4
    %v676 = vadd.f32 %v674, %v675
    %v677 = vrot.slane %v676, 2
    %v678 = vadd.f32 %v676, %v677
    %v679 = vrot.slane %v678, 1
    %v680 = vadd.f32 %v678, %v679
    %s681 = sld [smem:[#allocation3]]
    %v682 = vstv %s681
    %v683 = vadd.f32 %v671, %v682
    %v684 = vadd.f32 %v680, %v682
    %v687 = vrot.slane %v684, 7
    %vm688 = vcmask 1040384
    %v689 = vsel %vm688, %v683, %v687
    %v691 = vlaneseq
    %vm692 = vcmp.ge.s32.totalorder %v691, 0
    %vm693 = vcmp.lt.s32.totalorder %v691, 256
    %vm694 = vmand %vm692, %vm693
    %695 = vst.msk [vmem:[#allocation4] sm:$0x3] %vm694, %v689
    // Predicated region
    $region34: #{tpu_custom_call.1} parent=1 // pred_check
      _
    $region35: #{tpu_custom_call.1} parent=1 // pred_check_branch
      %697 = sbr.rel (0) target = $region37
    $region36: #{tpu_custom_call.1} parent=1 // pred_region
      %699 = vsyncadd [#allocation5], 0
      %s701 = sshll.u32 [#allocation4], 4
      %s702 = int_to_ptr.vmem [resolvable:$true] %s701
      %s703 = sshll.u32 %s8, 4
      %s704 = int_to_ptr.hbm [resolvable:$true] %s703
      %706 = dma.vmem_to_hbm [thread:$0]  %s702, 32, %s704, [#allocation5]
    $region37: #{tpu_custom_call.1} parent=1 // pred_fallthru
      _
    // Predicated region
    $region38: #{tpu_custom_call.1} parent=1 // pred_check
      _
    $region39: #{tpu_custom_call.1} parent=1 // pred_check_branch
      %708 = sbr.rel (0) target = $region41
    $region40: #{tpu_custom_call.1} parent=1 // pred_region
      %710 = dma.done [#allocation5], 32
    $region41: #{tpu_custom_call.1} parent=1 // pred_fallthru
      _
    %711 = vsyncpa [#allocation5], 1

</llo_original>
